<compile_context>
chip_gen: v5e
topology: v5e:2x2
jax: 0.10.0
libtpu: 0.0.40
codegen_flags: <defaults>
</compile_context>

<pallas_src>
import functools

import numpy as np

import jax
import jax.numpy as jnp
from jax.experimental import pallas as pl
from jax.experimental.pallas import tpu as pltpu


def _shortcut_kernel(x_ref, sel_ref, o_ref, *, rows_pad, rows_mid):
    """One batch-block of the option-A shortcut.

    x_ref  : (nb, c*hg,     2*g*W)  -- 2g consecutive input H rows flattened per lane-row
    sel_ref: (2*g*W, g*W2)          -- 0/1 subsample matrix, resident via constant index_map
    o_ref  : (nb, c_out*hg, g*W2)   -- g output H rows flattened per lane-row
    """
    nb, r_in, l_in = x_ref.shape
    m_out = o_ref.shape[-1]

    # Leading-dims-only merge; with c*hg a multiple of 8 this is layout-free (no sublane repack).
    rows = x_ref[...].reshape(nb * r_in, l_in)

    # Stride-2 H/W subsample as one MXU matmul against the resident 0/1 selection matrix.
    # Exact regardless of accumulate dtype: each column of sel has exactly one nonzero (1.0),
    # so no rounding can occur; f32 inputs take Mosaic's native (exact) f32 matmul path.
    sub = jnp.dot(rows, sel_ref[...], preferred_element_type=o_ref.dtype)
    sub = sub.reshape(nb, r_in, m_out)

    # Channel zero-padding as three full-lane-width slab stores (the channel axis is a major
    # part of the folded row dim) -- no concat / extra output-block materialization.
    if rows_pad > 0:
        o_ref[:, :rows_pad, :] = jnp.zeros((nb, rows_pad, m_out), o_ref.dtype)
        o_ref[:, rows_pad + rows_mid:, :] = jnp.zeros((nb, rows_pad, m_out), o_ref.dtype)
    o_ref[:, rows_pad:rows_pad + rows_mid, :] = sub


def _pick_batch_block(n, bytes_per_image, *, target_bytes=4 << 20, min_steps=4):
    """Batch elements per grid step.

    Targets ~4 MiB input blocks (so the ~0.35 us per-step overhead is negligible) while
    keeping >= min_steps grid steps so both v7x TensorCores get >= 2 steps each and the
    BlockSpec double-buffering overlaps DMA with compute.  Prefers an exact divisor of n;
    falls back to a ragged (pl.cdiv) last block when n has no good divisor.
    """
    cap = max(1, min(n, target_bytes // max(1, bytes_per_image)))
    if n >= min_steps:
        cap = min(cap, max(1, n // min_steps))
    best_div = max(d for d in range(1, cap + 1) if n % d == 0)
    return best_div if 2 * best_div > cap else cap


def lambda_layer(x_nchw, planes):
    """ResNet-CIFAR option-A shortcut:
    F.pad(x[:, :, ::2, ::2], (0,0,0,0, planes//4, planes//4)) — NCHW in, NCHW out."""
    n, c, h, w = x_nchw.shape
    if h % 2 or w % 2:
        raise ValueError("even spatial dims expected (CIFAR ResNet)")
    if not jnp.issubdtype(x_nchw.dtype, jnp.floating):
        # TODO(synk): integer activations would need a non-MXU copy path; option-A shortcuts
        # only ever see float activations, so guard instead of faking it.
        raise ValueError("lambda_layer expects a floating-point activation dtype")

    pad = planes // 4
    c_out = c + 2 * pad
    h2, w2 = h // 2, w // 2

    # Smallest group of g output rows per lane-row with g*W2 >= 128 (lane-dense stores) —
    # keeping g minimal keeps the selection-matmul K = 2*g*W small (matters on v5e / v7x).
    g = h2
    for cand in range(1, h2 + 1):
        if h2 % cand == 0 and cand * w2 >= 128:
            g = cand
            break
    hg = h2 // g
    l_in = 2 * g * w      # 2g input rows (even+odd) flattened per lane-row
    m_out = g * w2        # g output rows flattened per lane-row

    # 0/1 subsample matrix, built ONCE here (hoisted out of the kernel body); fetched once
    # by the constant index_map below and kept VMEM-resident for the whole grid.
    jj = np.arange(m_out)
    src = 2 * (jj // w2) * w + 2 * (jj % w2)                 # even-row / even-col flat source
    sel = jnp.asarray(np.arange(l_in)[:, None] == src[None, :], dtype=x_nchw.dtype)

    # Metadata-only reshape (adjacent trailing dims): fold (c, hg) so blocks are 3-D and
    # sublane-dense; no transpose, no data movement.
    x_r = x_nchw.reshape(n, c * hg, l_in)

    elem = jnp.dtype(x_nchw.dtype).itemsize
    nb = _pick_batch_block(n, c * h * w * elem)
    grid = (pl.cdiv(n, nb),)

    rows_pad, rows_mid = pad * hg, c * hg
    kernel = functools.partial(_shortcut_kernel, rows_pad=rows_pad, rows_mid=rows_mid)

    cost = pl.CostEstimate(
        flops=2 * (n * c * hg) * l_in * m_out,               # selection matmul MACs
        transcendentals=0,
        bytes_accessed=(n * c * h * w + n * c_out * h2 * w2 + l_in * m_out) * elem,
    )

    out_r = pl.pallas_call(
        kernel,
        out_shape=jax.ShapeDtypeStruct((n, c_out * hg, m_out), x_nchw.dtype),
        grid=grid,
        in_specs=[
            pl.BlockSpec((nb, c * hg, l_in), lambda b: (b, 0, 0)),
            pl.BlockSpec((l_in, m_out), lambda b: (0, 0)),   # fetched once, stays resident
        ],
        out_specs=pl.BlockSpec((nb, c_out * hg, m_out), lambda b: (b, 0, 0)),
        compiler_params=pltpu.CompilerParams(
            dimension_semantics=("parallel",),
            vmem_limit_bytes=32 * 1024 * 1024,
        ),
        cost_estimate=cost,
    )(x_r, sel)

    # Free reshape back to the PyTorch NCHW output shape.
    return out_r.reshape(n, c_out, h2, w2)


if __name__ == "__main__":
    key = jax.random.PRNGKey(0)
    N, C, H, W = 2, 4, 16, 16
    planes = 8                       # pad = planes // 4 = 2 channels each side -> C_out = 8
    x = jax.random.normal(key, (N, C, H, W), dtype=jnp.float32)

    out = jax.block_until_ready(lambda_layer(x, planes))

    # Pure-JAX reference of the PyTorch lambda: F.pad(x[:, :, ::2, ::2], (0,0,0,0,pad,pad)).
    pad = planes // 4
    ref = jnp.pad(x[:, :, ::2, ::2], ((0, 0), (pad, pad), (0, 0), (0, 0)))
    assert out.shape == ref.shape == (N, C + 2 * pad, H // 2, W // 2)
    assert out.dtype == ref.dtype
    assert jnp.allclose(out, ref), "Pallas kernel output mismatch vs reference"
    print("KERNEL_OK")
</pallas_src>

<mosaic_0001>
module attributes {stable_mosaic.version = 11 : i64} {
  func.func @_shortcut_kernel(%arg0: i32, %arg1: memref<2x4x256xf32, #tpu.memory_space<vmem>>, %arg2: memref<256x64xf32, #tpu.memory_space<vmem>>, %arg3: memref<2x8x64xf32, #tpu.memory_space<vmem>>) attributes {dimension_semantics = [#tpu.dimension_semantics<parallel>], iteration_bounds = array<i64: 1>, scalar_prefetch = 0 : i64, scratch_operands = 0 : i64, tpu.core_type = #tpu.core_type<tc>, window_params = [{transform_indices = @transform_0, window_bounds = array<i64: 2, 4, 256>}, {pipeline_mode = #tpu.pipeline_mode<synchronous>, transform_indices = @transform_1, window_bounds = array<i64: 256, 64>}, {transform_indices = @transform_2, window_bounds = array<i64: 2, 8, 64>}]} {
    %c0 = arith.constant 0 : index
    %c0_0 = arith.constant 0 : index
    %c0_1 = arith.constant 0 : index
    %0 = vector.load %arg1[%c0, %c0_0, %c0_1] : memref<2x4x256xf32, #tpu.memory_space<vmem>>, vector<2x4x256xf32>
    %1 = vector.shape_cast %0 : vector<2x4x256xf32> to vector<8x256xf32>
    %c0_2 = arith.constant 0 : index
    %c0_3 = arith.constant 0 : index
    %2 = vector.load %arg2[%c0_2, %c0_3] : memref<256x64xf32, #tpu.memory_space<vmem>>, vector<256x64xf32>
    %cst = arith.constant dense<0.000000e+00> : vector<8x64xf32>
    %3 = tpu.matmul %1, %2, %cst {dimension_numbers = #tpu.dot_dimension_numbers<[1], [0], [0], [1], [0, 0, 1, 1], [], []>} : vector<8x256xf32>, vector<256x64xf32>, vector<8x64xf32> -> vector<8x64xf32>
    %4 = vector.shape_cast %3 : vector<8x64xf32> to vector<2x4x64xf32>
    %cst_4 = arith.constant 0.000000e+00 : f32
    %5 = vector.broadcast %cst_4 : f32 to vector<2x2x64xf32>
    %c0_5 = arith.constant 0 : index
    %c0_6 = arith.constant 0 : index
    %c0_7 = arith.constant 0 : index
    %6 = vector.load %arg3[%c0_5, %c0_6, %c0_7] : memref<2x8x64xf32, #tpu.memory_space<vmem>>, vector<2x2x64xf32>
    tpu.vector_store %arg3[%c0_5, %c0_6, %c0_7], %5 {strides = array<i32>} : memref<2x8x64xf32, #tpu.memory_space<vmem>>, vector<2x2x64xf32>,
    %cst_8 = arith.constant 0.000000e+00 : f32
    %7 = vector.broadcast %cst_8 : f32 to vector<2x2x64xf32>
    %c0_9 = arith.constant 0 : index
    %c6 = arith.constant 6 : index
    %c0_10 = arith.constant 0 : index
    %8 = vector.load %arg3[%c0_9, %c6, %c0_10] : memref<2x8x64xf32, #tpu.memory_space<vmem>>, vector<2x2x64xf32>
    tpu.vector_store %arg3[%c0_9, %c6, %c0_10], %7 {strides = array<i32>} : memref<2x8x64xf32, #tpu.memory_space<vmem>>, vector<2x2x64xf32>,
    %c0_11 = arith.constant 0 : index
    %c2 = arith.constant 2 : index
    %c0_12 = arith.constant 0 : index
    %9 = vector.load %arg3[%c0_11, %c2, %c0_12] : memref<2x8x64xf32, #tpu.memory_space<vmem>>, vector<2x4x64xf32>
    tpu.vector_store %arg3[%c0_11, %c2, %c0_12], %4 {strides = array<i32>} : memref<2x8x64xf32, #tpu.memory_space<vmem>>, vector<2x4x64xf32>,
    return
  }
  func.func @transform_0(%arg0: i32) -> (i32, i32, i32) {
    %c0_i32 = arith.constant 0 : i32
    %c0_i32_0 = arith.constant 0 : i32
    %c0_i32_1 = arith.constant 0 : i32
    return %arg0, %c0_i32, %c0_i32_0 : i32, i32, i32
  }
  func.func @transform_1(%arg0: i32) -> (i32, i32) {
    %c0_i32 = arith.constant 0 : i32
    %c0_i32_0 = arith.constant 0 : i32
    %c0_i32_1 = arith.constant 0 : i32
    return %c0_i32, %c0_i32_0 : i32, i32
  }
  func.func @transform_2(%arg0: i32) -> (i32, i32, i32) {
    %c0_i32 = arith.constant 0 : i32
    %c0_i32_0 = arith.constant 0 : i32
    %c0_i32_1 = arith.constant 0 : i32
    return %arg0, %c0_i32, %c0_i32_0 : i32, i32, i32
  }
}

</mosaic_0001>

<llo_original>
// kernel: tpu_custom_call.1
$region0: #{tpu_custom_call.1}
  #allocation0 [shape = 'u32[]', space=smem, size = 0x4, offset = 0x4, fixed_abs, tag = 'smem constant byte address 0x4 - core index']
  #allocation1 [shape = 'u32[72,128]{1,0:T(1,128)}', space=vmem, size = 0x9000, scoped, tag = 'internal scratch']
  %s0 = inlined_call_operand.vmem [shape: f32[2,4,256], index: 0, kind: input, shape index: {}]
  %s1 = inlined_call_operand.vmem [shape: f32[256,64], index: 1, kind: input, shape index: {}]
  %s2 = inlined_call_operand.hbm [shape: f32[2,8,64], index: 2, kind: output, shape index: {}]
  %s3 = sld [smem:[#allocation0]]
  $region18: #{tpu_custom_call.1} parent=0
    _
  %s5 = ssub.s32 1, %s3
  %s6 = scalar_select 0, %s5, %s3
  $region1: #{tpu_custom_call.1} parent=0
    #allocation2 [shape = 'u8[8192]{0}', space=vmem, size = 0x2000, scoped, tag = 'output window, operand 0, single buffered']
    #allocation3 [shape = 's32[1]{0}', space=sflag, size = 0x4, scoped, tag = 'scoped memory for tpu_custom_call.1']
    %7 = vsyncpa [#allocation3], 0
    // Predicated region
    $region2: #{tpu_custom_call.1} parent=1 // pred_check
      _
    $region3: #{tpu_custom_call.1} parent=1 // pred_check_branch
      %9 = sbr.rel (0) target = $region5
    $region4: #{tpu_custom_call.1} parent=1 // pred_region
      _
    $region5: #{tpu_custom_call.1} parent=1 // pred_fallthru
      _
    // Predicated region
    $region6: #{tpu_custom_call.1} parent=1 // pred_check
      _
    $region7: #{tpu_custom_call.1} parent=1 // pred_check_branch
      %11 = sbr.rel (0) target = $region9
    $region8: #{tpu_custom_call.1} parent=1 // pred_region
      _
    $region9: #{tpu_custom_call.1} parent=1 // pred_fallthru
      _
    %v12 = vld [vmem:[%s0] sm:$0xff]
    %v13 = vld [vmem:[%s0 + $0x8] sm:$0xff]
    %v14 = vld [vmem:[%s1] sm:$0xff]
    %v15 = vld [vmem:[%s1 + $0x8] sm:$0xff]
    %v16 = vld [vmem:[%s1 + $0x10] sm:$0xff]
    %v17 = vld [vmem:[%s1 + $0x18] sm:$0xff]
    %v18 = vld [vmem:[%s1 + $0x20] sm:$0xff]
    %v19 = vld [vmem:[%s1 + $0x28] sm:$0xff]
    %v20 = vld [vmem:[%s1 + $0x30] sm:$0xff]
    %v21 = vld [vmem:[%s1 + $0x38] sm:$0xff]
    %v22 = vld [vmem:[%s1 + $0x40] sm:$0xff]
    %v23 = vld [vmem:[%s1 + $0x48] sm:$0xff]
    %v24 = vld [vmem:[%s1 + $0x50] sm:$0xff]
    %v25 = vld [vmem:[%s1 + $0x58] sm:$0xff]
    %v26 = vld [vmem:[%s1 + $0x60] sm:$0xff]
    %v27 = vld [vmem:[%s1 + $0x68] sm:$0xff]
    %v28 = vld [vmem:[%s1 + $0x70] sm:$0xff]
    %v29 = vld [vmem:[%s1 + $0x78] sm:$0xff]
    %v30 = vld [vmem:[%s1 + $0x80] sm:$0xff]
    %v31 = vld [vmem:[%s1 + $0x88] sm:$0xff]
    %v32 = vld [vmem:[%s1 + $0x90] sm:$0xff]
    %v33 = vld [vmem:[%s1 + $0x98] sm:$0xff]
    %v34 = vld [vmem:[%s1 + $0xa0] sm:$0xff]
    %v35 = vld [vmem:[%s1 + $0xa8] sm:$0xff]
    %v36 = vld [vmem:[%s1 + $0xb0] sm:$0xff]
    %v37 = vld [vmem:[%s1 + $0xb8] sm:$0xff]
    %v38 = vld [vmem:[%s1 + $0xc0] sm:$0xff]
    %v39 = vld [vmem:[%s1 + $0xc8] sm:$0xff]
    %v40 = vld [vmem:[%s1 + $0xd0] sm:$0xff]
    %v41 = vld [vmem:[%s1 + $0xd8] sm:$0xff]
    %v42 = vld [vmem:[%s1 + $0xe0] sm:$0xff]
    %v43 = vld [vmem:[%s1 + $0xe8] sm:$0xff]
    %v44 = vld [vmem:[%s1 + $0xf0] sm:$0xff]
    %v45 = vld [vmem:[%s1 + $0xf8] sm:$0xff]
    %48 = vst [vmem:[#allocation1] ss:$2 sm:$0xff] %v12
    %s49 = scalar_lea.vmem [#allocation1], 1
    %50 = vst [vmem:[%s49] ss:$2 sm:$0xff] %v13
    %v51 = vld.sshfl [vmem:[#allocation1] sm:$0xff pattern:$0x75316420]
    %v52 = vld.sshfl [vmem:[#allocation1 + $0x8] sm:$0xff pattern:$0x75316420]
    %55 = vmatpush.msra.mxu0 %v29
    %56 = vmatpush.msra.mxu0 %v28
    %57 = vmatpush.msra.mxu0 %v27
    %58 = vmatpush.msra.mxu0 %v26
    %59 = vmatpush.msra.mxu0 %v25
    %60 = vmatpush.msra.mxu0 %v24
    %61 = vmatpush.msra.mxu0 %v23
    %62 = vmatpush.msra.mxu0 %v22
    %63 = vmatpush.msra.mxu0 %v21
    %64 = vmatpush.msra.mxu0 %v20
    %65 = vmatpush.msra.mxu0 %v19
    %66 = vmatpush.msra.mxu0 %v18
    %67 = vmatpush.msra.mxu0 %v17
    %68 = vmatpush.msra.mxu0 %v16
    %69 = vmatpush.msra.mxu0 %v15
    %70 = vmatpush.msra.mxu0 %v14
    %71 = vmatmul.f32.gmra.mxu0 %v51
    %v72 = vpop.f32.mrf.mxu0
    %v73 = vadd.f32 0.0, %v72
    %74 = vdwg.mxu0
    %75 = vmatpush.msra.mxu0 %v45
    %76 = vmatpush.msra.mxu0 %v44
    %77 = vmatpush.msra.mxu0 %v43
    %78 = vmatpush.msra.mxu0 %v42
    %79 = vmatpush.msra.mxu0 %v41
    %80 = vmatpush.msra.mxu0 %v40
    %81 = vmatpush.msra.mxu0 %v39
    %82 = vmatpush.msra.mxu0 %v38
    %83 = vmatpush.msra.mxu0 %v37
    %84 = vmatpush.msra.mxu0 %v36
    %85 = vmatpush.msra.mxu0 %v35
    %86 = vmatpush.msra.mxu0 %v34
    %87 = vmatpush.msra.mxu0 %v33
    %88 = vmatpush.msra.mxu0 %v32
    %89 = vmatpush.msra.mxu0 %v31
    %90 = vmatpush.msra.mxu0 %v30
    %91 = vmatmul.f32.gmra.mxu0 %v52
    %v92 = vpop.f32.mrf.mxu0
    %v93 = vadd.f32 %v73, %v92
    %94 = vdwg.mxu0
    %v96 = vrot.slane %v93, 4
    %vm98 = vcmask 517120
    %99 = vst.msk [vmem:[#allocation2] sm:$0x3] %vm98, 0.0
    %100 = vst.msk [vmem:[#allocation2 + $0x8] sm:$0x3] %vm98, 0.0
    %101 = vst.msk [vmem:[#allocation2 + $0x6] sm:$0x3] %vm98, 0.0
    %102 = vst.msk [vmem:[#allocation2 + $0xe] sm:$0x3] %vm98, 0.0
    %vm103 = vcmask 519168
    %104 = vst.msk [vmem:[#allocation2 + $0x2] sm:$0xf] %vm103, %v93
    %105 = vst.msk [vmem:[#allocation2 + $0xa] sm:$0xf] %vm103, %v96
    // Predicated region
    $region10: #{tpu_custom_call.1} parent=1 // pred_check
      _
    $region11: #{tpu_custom_call.1} parent=1 // pred_check_branch
      %107 = sbr.rel (0) target = $region13
    $region12: #{tpu_custom_call.1} parent=1 // pred_region
      %109 = vsyncadd [#allocation3], 0
      %s110 = sshll.u32 [#allocation2], 4
      %s111 = int_to_ptr.vmem [resolvable:$true] %s110
      %s112 = sshll.u32 %s2, 4
      %s113 = int_to_ptr.hbm [resolvable:$true] %s112
      %118 = dma.vmem_to_hbm [thread:$0]  %s111, 256, %s113, [#allocation3], 128, 128, 8
    $region13: #{tpu_custom_call.1} parent=1 // pred_fallthru
      _
    // Predicated region
    $region14: #{tpu_custom_call.1} parent=1 // pred_check
      _
    $region15: #{tpu_custom_call.1} parent=1 // pred_check_branch
      %120 = sbr.rel (0) target = $region17
    $region16: #{tpu_custom_call.1} parent=1 // pred_region
      %122 = dma.done [#allocation3], 256
    $region17: #{tpu_custom_call.1} parent=1 // pred_fallthru
      _
    %123 = vsyncpa [#allocation3], 1

</llo_original>
